<compile_context>
chip_gen: v5e
topology: v5e:2x2
jax: 0.10.0
libtpu: 0.0.40
codegen_flags: <defaults>
</compile_context>

<pallas_src>
import functools

import jax
import jax.numpy as jnp
from jax import lax
from jax.experimental import pallas as pl
from jax.experimental.pallas import tpu as pltpu

_LANE = 128
_SUBLANE = 8
# Per-input-block HBM->VMEM byte budget.  8 MiB keeps DMAs long enough to amortize the
# ~0.35us per-grid-step overhead (matters most on v7x @3.2TB/s) while the explicitly
# computed vmem_limit_bytes below keeps the double-buffered working set <= ~40-48 MiB
# (v7x: 64 MiB physical; v5e/v6e: 128 MiB physical, 16/32 MiB scoped default).
_DEF_BLOCK_BYTES = 8 * 1024 * 1024
# Channel loops with <= this many channels are statically unrolled; beyond it the
# argmax / weighted-sum kernels switch to lax.fori_loop (bounded live ranges).
_MAX_UNROLL_C = 16


# --------------------------------------------------------------------------------- #
# layout / tiling helpers
# --------------------------------------------------------------------------------- #
def _sublane(dtype):
    """Second-minor tile quantum for this dtype (8 for f32, 16 for bf16, 32 for int8)."""
    itemsize = jnp.dtype(dtype).itemsize
    return max(_SUBLANE, _SUBLANE * (4 // max(1, itemsize)))


def _view_rows_cols(x):
    """(B, C, H, W) -> (B, C, rows, cols) lane-dense view (pure metadata reshape).

    If H*W is a multiple of 128 the spatial extent is folded into (H*W/128, 128) so
    every channel plane fills full (8, 128) vregs.  Otherwise (H, W) is kept as the
    (sublane, lane) pair — correct, just lane-sparse when W < 128.
    """
    b, c, h, w = x.shape
    n = h * w
    if n % _LANE == 0:
        return x.reshape(b, c, n // _LANE, _LANE), n // _LANE, _LANE
    # TODO(synk): H*W not a multiple of 128 keeps lane utilization at W/128 of peak.
    return x, h, w


def _choose_rows_tile(rows, bytes_per_row, block_bytes, sublane, min_tiles=1):
    """Largest row tile that (a) divides `rows`, (b) is a multiple of `sublane` unless
    it equals the full extent, (c) fits `block_bytes`, (d) yields >= `min_tiles` tiles.
    Falls back to the full extent (caller budgets VMEM for it) when no such tile exists.
    """
    if min_tiles <= 1 and rows * bytes_per_row <= block_bytes:
        return rows
    cap = min(block_bytes // max(1, bytes_per_row), rows // max(1, min_tiles))
    best = 0
    t = sublane
    while t <= cap:
        if rows % t == 0:
            best = t
        t += sublane
    # TODO(synk): pathological row extents with no clean divisor fall back to the full
    # slab; very large untileable slabs could then exceed the 48 MiB VMEM cap.
    return best if best else rows


def _vmem_limit(in_block, out_block, tile_elems, n_temps):
    """Explicit scoped-VMEM request: double-buffered in/out blocks + live f32/int32
    scan temporaries + slack.  Capped at 48 MiB (v7x physical VMEM is 64 MiB / TC)."""
    est = 2 * in_block + 2 * out_block + n_temps * tile_elems * 4 + (2 << 20)
    return int(min(48 << 20, max(16 << 20, est)))


# --------------------------------------------------------------------------------- #
# Kernel: channel argmax (torch .max(dim=1)[1]); first-max tie-break; int32 output.
# --------------------------------------------------------------------------------- #
def _argmax_kernel(x_ref, o_ref):
    """Channel argmax of a (C, rows, cols) block -> (1, rows, cols) int32.

    Comparison happens in the input dtype (bf16 ordering is exact, so no f32 upcast;
    Mosaic legalizes the compare on v5e).  Strict '>' keeps the first max, matching
    torch.max(dim=1)[1] / jnp.argmax tie-breaking.
    """
    n_chan = x_ref.shape[0]
    if n_chan <= _MAX_UNROLL_C:
        m = x_ref[0]
        idx = jnp.zeros(m.shape, jnp.int32)
        for c in range(1, n_chan):                       # static unrolled running scan
            v = x_ref[c]
            newer = v > m
            m = jnp.where(newer, v, m)
            idx = jnp.where(newer, jnp.int32(c), idx)
    else:
        def body(c, carry):
            m, idx = carry
            v = x_ref[c]
            newer = v > m
            return jnp.where(newer, v, m), jnp.where(newer, c, idx)

        m0 = x_ref[0]
        m, idx = lax.fori_loop(1, n_chan, body,
                               (m0, jnp.zeros(m0.shape, jnp.int32)), unroll=2)
    o_ref[0] = idx


def argmax_channel(x, *, block_bytes=_DEF_BLOCK_BYTES):
    """torch `x.max(dim=1, keepdim=True)[1]` for x of shape (B, C, H, W).

    Returns int32 (torch returns int64; values identical for these sizes).
    # TODO(synk): emit int8/int16 instead if downstream tolerates it (less write traffic).
    """
    b, c, h, w = x.shape
    x4, rows, cols = _view_rows_cols(x)
    itemsize = jnp.dtype(x.dtype).itemsize
    rt = _choose_rows_tile(rows, c * cols * itemsize, block_bytes, _sublane(x.dtype),
                           min_tiles=2 if b == 1 else 1)     # keep both v7x TCs busy
    n_tiles = rows // rt
    in_blk = c * rt * cols * itemsize
    out_blk = rt * cols * 4
    out = pl.pallas_call(
        _argmax_kernel,
        out_shape=jax.ShapeDtypeStruct((b, 1, rows, cols), jnp.int32),
        grid=(b, n_tiles),
        in_specs=[pl.BlockSpec((None, c, rt, cols), lambda bi, ti: (bi, 0, ti, 0))],
        out_specs=pl.BlockSpec((None, 1, rt, cols), lambda bi, ti: (bi, 0, ti, 0)),
        compiler_params=pltpu.CompilerParams(
            dimension_semantics=("parallel", "parallel"),
            vmem_limit_bytes=_vmem_limit(in_blk, out_blk, rt * cols, n_temps=5)),
    )(x4)
    return out.reshape(b, 1, h, w)


# --------------------------------------------------------------------------------- #
# Fused targets kernel (single pass): GT channel argmax + weightI map.
#   cnts_c  = sum_pix targets[c]
#   inst_c  = (ht*wd / (cnts_c + 1)) ** (1/3)
#   w_c     = clamp(inst_c * sem_wght[c], 1, 30)
#   weightI = sum_c w_c * targets[c]
#   gts     = argmax_c targets[c]
# --------------------------------------------------------------------------------- #
def _fused_targets_kernel(sem_ref, t_ref, gts_ref, w_ref, *, n_pixels):
    """One batch's full (C, rows, cols) GT slab is resident in VMEM.

    Phase 1: per-channel pixel counts -> clamped per-channel weights (XLU reduces +
             EUP exp/log kept out of the phase-2 VPU stream).
    Phase 2: channel argmax ('gts') + weighted channel sum ('weightI'); the block is
             re-read from VMEM, not HBM.
    """
    b = pl.program_id(0)
    n_chan = t_ref.shape[0]

    def load(c):
        return t_ref[c].astype(jnp.float32)              # (rows, cols)

    # TODO(synk): for very large GT channel counts switch both phases to lax.fori_loop
    # with a small VMEM scratch holding the per-channel weights.
    # ---- phase 1: counts -> weights (tiny (1, 1) values) --------------------------
    wghts = []
    for c in range(n_chan):
        cnt = jnp.sum(load(c), keepdims=True)                             # (1, 1)
        inst = jnp.exp(jnp.log(n_pixels / (cnt + 1.0)) * (1.0 / 3.0))     # cube root
        wghts.append(jnp.clip(inst * sem_ref[b, c], 1.0, 30.0))           # (1, 1)

    # ---- phase 2: argmax + weighted channel sum -----------------------------------
    t_c = load(0)
    m = t_c
    idx = jnp.zeros(t_c.shape, jnp.int32)
    acc = wghts[0] * t_c
    for c in range(1, n_chan):
        t_c = load(c)
        acc = acc + wghts[c] * t_c
        newer = t_c > m                                   # strict '>' keeps first max
        m = jnp.where(newer, t_c, m)
        idx = jnp.where(newer, jnp.int32(c), idx)
    gts_ref[0] = idx
    w_ref[0] = acc


# Two-pass (spatially tiled) fallback for slabs too big for a single VMEM block,
# and for bs == 1 (so the grid has >= 2 parallel programs for v7x megacore).
def _counts_gts_kernel(t_ref, gts_ref, cnt_ref):
    """Pass 1: channel argmax + per-tile per-channel pixel counts (one HBM read)."""
    n_chan = t_ref.shape[0]
    t_c = t_ref[0].astype(jnp.float32)
    m = t_c
    idx = jnp.zeros(t_c.shape, jnp.int32)
    cnt_ref[pl.ds(0, 1), :] = jnp.sum(t_c, keepdims=True)
    # TODO(synk): switch to lax.fori_loop + scratch for very large GT channel counts.
    for c in range(1, n_chan):
        t_c = t_ref[c].astype(jnp.float32)
        cnt_ref[pl.ds(c, 1), :] = jnp.sum(t_c, keepdims=True)
        newer = t_c > m
        m = jnp.where(newer, t_c, m)
        idx = jnp.where(newer, jnp.int32(c), idx)
    gts_ref[0] = idx


def _weighted_sum_kernel(w_ref, t_ref, o_ref):
    """Pass 2: weightI = sum_c weights[b, c] * targets[b, c] (weights in SMEM)."""
    b = pl.program_id(0)
    n_chan = t_ref.shape[0]
    if n_chan <= _MAX_UNROLL_C:
        acc = w_ref[b, 0] * t_ref[0].astype(jnp.float32)
        for c in range(1, n_chan):
            acc = acc + w_ref[b, c] * t_ref[c].astype(jnp.float32)
    else:
        def body(c, acc):
            return acc + w_ref[b, c] * t_ref[c].astype(jnp.float32)

        acc = lax.fori_loop(1, n_chan, body,
                            w_ref[b, 0] * t_ref[0].astype(jnp.float32))
    o_ref[0] = acc


def gts_and_weight_map(targets, sem_wght, *, block_bytes=_DEF_BLOCK_BYTES):
    """Fused GT argmax + weightI (process_onescale hot path).

    targets  : (bs, ch, ht, wd), any float dtype (cast happens inside the kernels)
    sem_wght : (bs, ch) per-GT-object class weights
    Returns (gts int32 [bs,1,ht,wd], weightI float32 [bs,1,ht,wd]).
    """
    bs, ch, ht, wd = targets.shape
    t4, rows, cols = _view_rows_cols(targets)
    itemsize = jnp.dtype(targets.dtype).itemsize
    sem = sem_wght.astype(jnp.float32)                    # tiny (bs, ch) -> SMEM
    n_pix = float(ht * wd)
    # Prefer >= 2 spatial tiles (two-pass path) when bs == 1 so both v7x TCs get work.
    rt = _choose_rows_tile(rows, ch * cols * itemsize, block_bytes,
                           _sublane(targets.dtype),
                           min_tiles=2 if bs == 1 else 1)
    tile_elems = rt * cols
    in_blk = ch * tile_elems * itemsize

    if rt == rows:
        # ---- single pass: targets read from HBM exactly once ----------------------
        gts, w_i = pl.pallas_call(
            functools.partial(_fused_targets_kernel, n_pixels=n_pix),
            out_shape=(jax.ShapeDtypeStruct((bs, 1, rows, cols), jnp.int32),
                       jax.ShapeDtypeStruct((bs, 1, rows, cols), jnp.float32)),
            grid_spec=pltpu.PrefetchScalarGridSpec(
                num_scalar_prefetch=1,
                grid=(bs,),
                in_specs=[pl.BlockSpec((None, ch, rows, cols),
                                       lambda b, s: (b, 0, 0, 0))],
                out_specs=[pl.BlockSpec((None, 1, rows, cols), lambda b, s: (b, 0, 0, 0)),
                           pl.BlockSpec((None, 1, rows, cols), lambda b, s: (b, 0, 0, 0))]),
            compiler_params=pltpu.CompilerParams(
                dimension_semantics=("parallel",),
                vmem_limit_bytes=_vmem_limit(in_blk, 2 * tile_elems * 4,
                                             tile_elems, n_temps=7)),
        )(sem, t4)
    else:
        n_tiles = rows // rt
        # ---- pass 1: gts argmax + per-tile per-channel counts (1 read of targets) --
        gts, part = pl.pallas_call(
            _counts_gts_kernel,
            out_shape=(jax.ShapeDtypeStruct((bs, 1, rows, cols), jnp.int32),
                       jax.ShapeDtypeStruct((bs, n_tiles, ch, 1), jnp.float32)),
            grid=(bs, n_tiles),
            in_specs=[pl.BlockSpec((None, ch, rt, cols), lambda b, t: (b, 0, t, 0))],
            out_specs=(pl.BlockSpec((None, 1, rt, cols), lambda b, t: (b, 0, t, 0)),
                       pl.BlockSpec((None, None, ch, 1), lambda b, t: (b, t, 0, 0))),
            compiler_params=pltpu.CompilerParams(
                dimension_semantics=("parallel", "parallel"),
                vmem_limit_bytes=_vmem_limit(in_blk, tile_elems * 4 + ch * 4,
                                             tile_elems, n_temps=5)),
        )(t4)
        # tiny per-(batch, channel) weight math: plain XLA glue on (bs, ch) scalars
        cnts = jnp.sum(part[:, :, :, 0], axis=1)                          # (bs, ch)
        inst = (n_pix / (cnts + 1.0)) ** (1.0 / 3.0)
        weights = jnp.clip(inst * sem, 1.0, 30.0).astype(jnp.float32)     # (bs, ch)
        # ---- pass 2: weightI = sum_c weights[b, c] * targets[b, c] -----------------
        w_i = pl.pallas_call(
            _weighted_sum_kernel,
            out_shape=jax.ShapeDtypeStruct((bs, 1, rows, cols), jnp.float32),
            grid_spec=pltpu.PrefetchScalarGridSpec(
                num_scalar_prefetch=1,
                grid=(bs, n_tiles),
                in_specs=[pl.BlockSpec((None, ch, rt, cols),
                                       lambda b, t, w: (b, 0, t, 0))],
                out_specs=pl.BlockSpec((None, 1, rt, cols),
                                       lambda b, t, w: (b, 0, t, 0))),
            compiler_params=pltpu.CompilerParams(
                dimension_semantics=("parallel", "parallel"),
                vmem_limit_bytes=_vmem_limit(in_blk, tile_elems * 4,
                                             tile_elems, n_temps=4)),
        )(weights, t4)

    return gts.reshape(bs, 1, ht, wd), w_i.reshape(bs, 1, ht, wd)


# --------------------------------------------------------------------------------- #
# preds argmax over the FPN-scale list: one pallas_call per scale (no concatenation —
# a concat would be a full extra HBM read+write of every grouped preds tensor).
# --------------------------------------------------------------------------------- #
def _argmax_channel_list(preds, *, block_bytes=_DEF_BLOCK_BYTES):
    return [argmax_channel(p, block_bytes=block_bytes) for p in preds]


# --------------------------------------------------------------------------------- #
# Forward (single-scale path of LossEvaluate.forward, all sub-losses disabled)
# --------------------------------------------------------------------------------- #
def loss_evaluate_forward(preds, targets, target_boxes, class_weights,
                          preds_cls=None, fg_stCH=1, block_bytes=_DEF_BLOCK_BYTES):
    """
    preds         : list with one tensor [bs, K, ht, wd] (instance-channel logits)
    targets       : [bs, ch, ht, wd] GT object masks
    target_boxes  : list (len bs) of [ch, 5] boxes, last column = cls_id - 1
    class_weights : [num_classes] weights (ignore labels already filtered, as __init__ does)
    """
    if fg_stCH != 1:
        # TODO(synk): fg_stCH > 1 (panoptic) path needs the nearest/bilinear split resize_GT.
        raise NotImplementedError("only fg_stCH == 1 is implemented")
    if len(preds) > 1:
        # TODO(synk): multi-scale path needs target_hit_scale (host-side ragged selection).
        raise NotImplementedError("only the single-scale path (len(preds) == 1) is implemented")

    # target_ids = torch.stack(target_boxes)[:, :, -1]
    target_ids = jnp.stack(target_boxes, axis=0)[:, :, -1]            # [bs, ch]

    preds0 = preds[0]
    _, _, ht, wd = preds0.shape
    if targets.shape[2] != ht or targets.shape[3] != wd:
        # TODO(synk): bilinear align_corners resize_GT for mismatched GT/pred resolutions.
        raise NotImplementedError("GT must already be at the prediction resolution")

    # sem_wght = class_weights[target_ids.long()]  (tiny gather -> plain JAX glue).
    # cls_id - 1 == -1 (background) is remapped explicitly (torch negative indexing).
    n_cls = class_weights.shape[0]
    ids = target_ids.astype(jnp.int32)
    ids = jnp.where(ids < 0, ids + n_cls, ids)
    sem_wght = class_weights.astype(jnp.float32)[ids]                 # [bs, ch]

    # fused hot path: GT channel argmax ('gts') + weightI map
    target_labelI, weightI = gts_and_weight_map(targets, sem_wght, block_bytes=block_bytes)

    # process_step_multiChannel: with every sub-loss module == None no loss keys are
    # added; its softmax2d(preds) is dead code in this configuration.
    # TODO(synk): BinaryLoss / PermuInvLoss / MumfordShahLoss / IoULoss / ClassifyMCLoss /
    # Evaluate are external modules disabled via config (all alphas = 0, cls_en = 0, eval_en = 0).
    ret = {}
    ret['preds_0'] = preds[len(preds) // 2]      # exact torch semantics (== preds[0] here)
    ret['preds'] = _argmax_channel_list(preds, block_bytes=block_bytes)
    ret['gts'] = target_labelI                   # int32 (torch returns int64)
    ret['wghts'] = weightI
    return ret


# --------------------------------------------------------------------------------- #
# pure-JAX reference (for correctness checks)
# --------------------------------------------------------------------------------- #
def _ref_forward(preds, targets, target_boxes, class_weights):
    target_ids = jnp.stack(target_boxes, axis=0)[:, :, -1].astype(jnp.int32)
    gts = jnp.argmax(targets, axis=1, keepdims=True).astype(jnp.int32)
    _, _, ht, wd = targets.shape
    t = targets.astype(jnp.float32)
    cnts = t.sum(axis=(2, 3))
    inst = (ht * wd / (cnts + 1.0)) ** (1.0 / 3.0)
    sem = class_weights.astype(jnp.float32)[target_ids]   # negative ids wrap like torch
    w = jnp.clip(inst * sem, 1.0, 30.0)[:, :, None, None]
    weight_i = (w * t).sum(axis=1, keepdims=True)
    preds_arg = [jnp.argmax(p, axis=1, keepdims=True).astype(jnp.int32) for p in preds]
    return gts, weight_i, preds_arg


# --------------------------------------------------------------------------------- #
# self-test
# --------------------------------------------------------------------------------- #
if __name__ == "__main__":
    master = jax.random.PRNGKey(0)

    def make_inputs(bs, ch, ht, wd, n_cls, key, pred_dtype=jnp.float32):
        k1, k2, k3 = jax.random.split(key, 3)
        lbl = jax.random.randint(k1, (bs, ht, wd), 0, ch)
        targets = jax.nn.one_hot(lbl, ch, axis=1).astype(jnp.float32)      # [bs, ch, ht, wd]
        preds = [jax.random.normal(k2, (bs, ch, ht, wd), jnp.float32).astype(pred_dtype)]
        class_weights = jnp.linspace(1.0, 2.0, n_cls).astype(jnp.float32)
        # last column = cls_id - 1 (includes -1 entries to exercise the background wrap)
        cls_ids = (jax.random.randint(k3, (bs, ch), 0, n_cls) - 1).astype(jnp.float32)
        target_boxes = [
            jnp.concatenate([jnp.zeros((ch, 4), jnp.float32), cls_ids[b][:, None]], axis=1)
            for b in range(bs)
        ]
        return preds, targets, target_boxes, class_weights

    def check(tag, bs, ch, ht, wd, n_cls, key, pred_dtype=jnp.float32,
              block_bytes=_DEF_BLOCK_BYTES):
        preds, targets, target_boxes, class_weights = make_inputs(
            bs, ch, ht, wd, n_cls, key, pred_dtype)
        out = loss_evaluate_forward(preds, targets, target_boxes, class_weights,
                                    fg_stCH=1, block_bytes=block_bytes)
        jax.block_until_ready(out['wghts'])
        jax.block_until_ready(out['gts'])
        jax.block_until_ready(out['preds'][0])
        gts_ref, w_ref, preds_arg_ref = _ref_forward(preds, targets, target_boxes,
                                                     class_weights)
        assert bool(jnp.array_equal(out['preds_0'], preds[0])), tag + ": preds_0 mismatch"
        assert bool(jnp.array_equal(out['gts'], gts_ref)), tag + ": gts mismatch"
        assert bool(jnp.allclose(out['wghts'], w_ref, rtol=1e-5, atol=1e-5)), \
            tag + ": wghts mismatch"
        assert bool(jnp.array_equal(out['preds'][0], preds_arg_ref[0])), \
            tag + ": preds argmax mismatch"

    keys = jax.random.split(master, 6)
    # 1) main fused single-pass path (lane-dense (rows, 128) view)
    check("single_pass", bs=2, ch=4, ht=16, wd=16, n_cls=4, key=keys[0])
    # 2) bs == 1: spatially tiled two-pass path (keeps both v7x TensorCores busy)
    check("bs1_two_pass", bs=1, ch=4, ht=64, wd=64, n_cls=4, key=keys[1])
    # 3) H*W not a multiple of 128: (H, W) layout fallback, single pass
    check("non128_spatial", bs=2, ch=4, ht=16, wd=12, n_cls=4, key=keys[2])
    # 4) large channel count: fori_loop argmax path + unrolled fused targets
    check("large_C_single_pass", bs=2, ch=20, ht=8, wd=16, n_cls=6, key=keys[3])
    # 5) large channel count + bs == 1: two-pass path with fori_loop weighted sum
    check("large_C_two_pass", bs=1, ch=20, ht=32, wd=128, n_cls=6, key=keys[4])
    # 6) bf16 preds: native bf16 compare in the argmax kernel (no f32 upcast)
    check("bf16_preds", bs=2, ch=4, ht=16, wd=16, n_cls=4, key=keys[5],
          pred_dtype=jnp.bfloat16)

    print("KERNEL_OK")
</pallas_src>

<mosaic_0001>
module attributes {stable_mosaic.version = 11 : i64} {
  func.func @_fused_targets_kernel(%arg0: i32, %arg1: memref<2x4xf32, #tpu.memory_space<smem>>, %arg2: memref<1x4x2x128xf32, #tpu.memory_space<vmem>>, %arg3: memref<1x1x2x128xi32, #tpu.memory_space<vmem>>, %arg4: memref<1x1x2x128xf32, #tpu.memory_space<vmem>>) attributes {dimension_semantics = [#tpu.dimension_semantics<parallel>], iteration_bounds = array<i64: 2>, scalar_prefetch = 1 : i64, scratch_operands = 0 : i64, tpu.core_type = #tpu.core_type<tc>, window_params = [{transform_indices = @transform_0, window_bounds = array<i64: 1, 4, 2, 128>}, {transform_indices = @transform_1, window_bounds = array<i64: 1, 1, 2, 128>}, {transform_indices = @transform_2, window_bounds = array<i64: 1, 1, 2, 128>}]} {
    %c0 = arith.constant 0 : index
    %c0_0 = arith.constant 0 : index
    %c0_1 = arith.constant 0 : index
    %c0_2 = arith.constant 0 : index
    %0 = vector.load %arg2[%c0, %c0_0, %c0_1, %c0_2] : memref<1x4x2x128xf32, #tpu.memory_space<vmem>>, vector<1x1x2x128xf32>
    %1 = vector.shape_cast %0 : vector<1x1x2x128xf32> to vector<2x128xf32>
    %2 = vector.shape_cast %1 : vector<2x128xf32> to vector<1x2x128xf32>
    %cst = arith.constant dense<0.000000e+00> : vector<1xf32>
    %3 = vector.multi_reduction <add>, %2, %cst [1, 2] : vector<1x2x128xf32> to vector<1xf32>
    %4 = vector.shape_cast %3 : vector<1xf32> to vector<1x1x1xf32>
    %5 = vector.extract %4[0, 0, 0] : f32 from vector<1x1x1xf32>
    %6 = vector.broadcast %5 : f32 to vector<1x1xf32>
    %cst_3 = arith.constant 1.000000e+00 : f32
    %7 = vector.broadcast %cst_3 : f32 to vector<1x1xf32>
    %8 = arith.addf %6, %7 : vector<1x1xf32>
    %cst_4 = arith.constant 2.560000e+02 : f32
    %9 = vector.broadcast %cst_4 : f32 to vector<1x1xf32>
    %10 = arith.divf %9, %8 : vector<1x1xf32>
    %11 = math.log %10 : vector<1x1xf32>
    %cst_5 = arith.constant 0.333333343 : f32
    %12 = vector.broadcast %cst_5 : f32 to vector<1x1xf32>
    %13 = arith.mulf %11, %12 : vector<1x1xf32>
    %14 = math.exp %13 : vector<1x1xf32>
    %15 = arith.index_cast %arg0 : i32 to index
    %c0_6 = arith.constant 0 : index
    %16 = memref.load %arg1[%15, %c0_6] : memref<2x4xf32, #tpu.memory_space<smem>>
    %17 = vector.broadcast %16 : f32 to vector<1x1xf32>
    %18 = arith.mulf %14, %17 : vector<1x1xf32>
    %cst_7 = arith.constant 1.000000e+00 : f32
    %cst_8 = arith.constant 3.000000e+01 : f32
    %19 = vector.broadcast %cst_7 : f32 to vector<1x1xf32>
    %20 = arith.maximumf %19, %18 : vector<1x1xf32>
    %21 = vector.broadcast %cst_8 : f32 to vector<1x1xf32>
    %22 = arith.minimumf %21, %20 : vector<1x1xf32>
    %c0_9 = arith.constant 0 : index
    %c1 = arith.constant 1 : index
    %c0_10 = arith.constant 0 : index
    %c0_11 = arith.constant 0 : index
    %23 = vector.load %arg2[%c0_9, %c1, %c0_10, %c0_11] : memref<1x4x2x128xf32, #tpu.memory_space<vmem>>, vector<1x1x2x128xf32>
    %24 = vector.shape_cast %23 : vector<1x1x2x128xf32> to vector<2x128xf32>
    %25 = vector.shape_cast %24 : vector<2x128xf32> to vector<1x2x128xf32>
    %cst_12 = arith.constant dense<0.000000e+00> : vector<1xf32>
    %26 = vector.multi_reduction <add>, %25, %cst_12 [1, 2] : vector<1x2x128xf32> to vector<1xf32>
    %27 = vector.shape_cast %26 : vector<1xf32> to vector<1x1x1xf32>
    %28 = vector.extract %27[0, 0, 0] : f32 from vector<1x1x1xf32>
    %29 = vector.broadcast %28 : f32 to vector<1x1xf32>
    %cst_13 = arith.constant 1.000000e+00 : f32
    %30 = vector.broadcast %cst_13 : f32 to vector<1x1xf32>
    %31 = arith.addf %29, %30 : vector<1x1xf32>
    %cst_14 = arith.constant 2.560000e+02 : f32
    %32 = vector.broadcast %cst_14 : f32 to vector<1x1xf32>
    %33 = arith.divf %32, %31 : vector<1x1xf32>
    %34 = math.log %33 : vector<1x1xf32>
    %cst_15 = arith.constant 0.333333343 : f32
    %35 = vector.broadcast %cst_15 : f32 to vector<1x1xf32>
    %36 = arith.mulf %34, %35 : vector<1x1xf32>
    %37 = math.exp %36 : vector<1x1xf32>
    %38 = arith.index_cast %arg0 : i32 to index
    %c1_16 = arith.constant 1 : index
    %39 = memref.load %arg1[%38, %c1_16] : memref<2x4xf32, #tpu.memory_space<smem>>
    %40 = vector.broadcast %39 : f32 to vector<1x1xf32>
    %41 = arith.mulf %37, %40 : vector<1x1xf32>
    %cst_17 = arith.constant 1.000000e+00 : f32
    %cst_18 = arith.constant 3.000000e+01 : f32
    %42 = vector.broadcast %cst_17 : f32 to vector<1x1xf32>
    %43 = arith.maximumf %42, %41 : vector<1x1xf32>
    %44 = vector.broadcast %cst_18 : f32 to vector<1x1xf32>
    %45 = arith.minimumf %44, %43 : vector<1x1xf32>
    %c0_19 = arith.constant 0 : index
    %c2 = arith.constant 2 : index
    %c0_20 = arith.constant 0 : index
    %c0_21 = arith.constant 0 : index
    %46 = vector.load %arg2[%c0_19, %c2, %c0_20, %c0_21] : memref<1x4x2x128xf32, #tpu.memory_space<vmem>>, vector<1x1x2x128xf32>
    %47 = vector.shape_cast %46 : vector<1x1x2x128xf32> to vector<2x128xf32>
    %48 = vector.shape_cast %47 : vector<2x128xf32> to vector<1x2x128xf32>
    %cst_22 = arith.constant dense<0.000000e+00> : vector<1xf32>
    %49 = vector.multi_reduction <add>, %48, %cst_22 [1, 2] : vector<1x2x128xf32> to vector<1xf32>
    %50 = vector.shape_cast %49 : vector<1xf32> to vector<1x1x1xf32>
    %51 = vector.extract %50[0, 0, 0] : f32 from vector<1x1x1xf32>
    %52 = vector.broadcast %51 : f32 to vector<1x1xf32>
    %cst_23 = arith.constant 1.000000e+00 : f32
    %53 = vector.broadcast %cst_23 : f32 to vector<1x1xf32>
    %54 = arith.addf %52, %53 : vector<1x1xf32>
    %cst_24 = arith.constant 2.560000e+02 : f32
    %55 = vector.broadcast %cst_24 : f32 to vector<1x1xf32>
    %56 = arith.divf %55, %54 : vector<1x1xf32>
    %57 = math.log %56 : vector<1x1xf32>
    %cst_25 = arith.constant 0.333333343 : f32
    %58 = vector.broadcast %cst_25 : f32 to vector<1x1xf32>
    %59 = arith.mulf %57, %58 : vector<1x1xf32>
    %60 = math.exp %59 : vector<1x1xf32>
    %61 = arith.index_cast %arg0 : i32 to index
    %c2_26 = arith.constant 2 : index
    %62 = memref.load %arg1[%61, %c2_26] : memref<2x4xf32, #tpu.memory_space<smem>>
    %63 = vector.broadcast %62 : f32 to vector<1x1xf32>
    %64 = arith.mulf %60, %63 : vector<1x1xf32>
    %cst_27 = arith.constant 1.000000e+00 : f32
    %cst_28 = arith.constant 3.000000e+01 : f32
    %65 = vector.broadcast %cst_27 : f32 to vector<1x1xf32>
    %66 = arith.maximumf %65, %64 : vector<1x1xf32>
    %67 = vector.broadcast %cst_28 : f32 to vector<1x1xf32>
    %68 = arith.minimumf %67, %66 : vector<1x1xf32>
    %c0_29 = arith.constant 0 : index
    %c3 = arith.constant 3 : index
    %c0_30 = arith.constant 0 : index
    %c0_31 = arith.constant 0 : index
    %69 = vector.load %arg2[%c0_29, %c3, %c0_30, %c0_31] : memref<1x4x2x128xf32, #tpu.memory_space<vmem>>, vector<1x1x2x128xf32>
    %70 = vector.shape_cast %69 : vector<1x1x2x128xf32> to vector<2x128xf32>
    %71 = vector.shape_cast %70 : vector<2x128xf32> to vector<1x2x128xf32>
    %cst_32 = arith.constant dense<0.000000e+00> : vector<1xf32>
    %72 = vector.multi_reduction <add>, %71, %cst_32 [1, 2] : vector<1x2x128xf32> to vector<1xf32>
    %73 = vector.shape_cast %72 : vector<1xf32> to vector<1x1x1xf32>
    %74 = vector.extract %73[0, 0, 0] : f32 from vector<1x1x1xf32>
    %75 = vector.broadcast %74 : f32 to vector<1x1xf32>
    %cst_33 = arith.constant 1.000000e+00 : f32
    %76 = vector.broadcast %cst_33 : f32 to vector<1x1xf32>
    %77 = arith.addf %75, %76 : vector<1x1xf32>
    %cst_34 = arith.constant 2.560000e+02 : f32
    %78 = vector.broadcast %cst_34 : f32 to vector<1x1xf32>
    %79 = arith.divf %78, %77 : vector<1x1xf32>
    %80 = math.log %79 : vector<1x1xf32>
    %cst_35 = arith.constant 0.333333343 : f32
    %81 = vector.broadcast %cst_35 : f32 to vector<1x1xf32>
    %82 = arith.mulf %80, %81 : vector<1x1xf32>
    %83 = math.exp %82 : vector<1x1xf32>
    %84 = arith.index_cast %arg0 : i32 to index
    %c3_36 = arith.constant 3 : index
    %85 = memref.load %arg1[%84, %c3_36] : memref<2x4xf32, #tpu.memory_space<smem>>
    %86 = vector.broadcast %85 : f32 to vector<1x1xf32>
    %87 = arith.mulf %83, %86 : vector<1x1xf32>
    %cst_37 = arith.constant 1.000000e+00 : f32
    %cst_38 = arith.constant 3.000000e+01 : f32
    %88 = vector.broadcast %cst_37 : f32 to vector<1x1xf32>
    %89 = arith.maximumf %88, %87 : vector<1x1xf32>
    %90 = vector.broadcast %cst_38 : f32 to vector<1x1xf32>
    %91 = arith.minimumf %90, %89 : vector<1x1xf32>
    %c0_39 = arith.constant 0 : index
    %c0_40 = arith.constant 0 : index
    %c0_41 = arith.constant 0 : index
    %c0_42 = arith.constant 0 : index
    %92 = vector.load %arg2[%c0_39, %c0_40, %c0_41, %c0_42] : memref<1x4x2x128xf32, #tpu.memory_space<vmem>>, vector<1x1x2x128xf32>
    %93 = vector.shape_cast %92 : vector<1x1x2x128xf32> to vector<2x128xf32>
    %c0_i32 = arith.constant 0 : i32
    %94 = vector.broadcast %c0_i32 : i32 to vector<2x128xi32>
    %95 = vector.broadcast %22 : vector<1x1xf32> to vector<2x128xf32>
    %96 = arith.mulf %95, %93 : vector<2x128xf32>
    %c0_43 = arith.constant 0 : index
    %c1_44 = arith.constant 1 : index
    %c0_45 = arith.constant 0 : index
    %c0_46 = arith.constant 0 : index
    %97 = vector.load %arg2[%c0_43, %c1_44, %c0_45, %c0_46] : memref<1x4x2x128xf32, #tpu.memory_space<vmem>>, vector<1x1x2x128xf32>
    %98 = vector.shape_cast %97 : vector<1x1x2x128xf32> to vector<2x128xf32>
    %99 = vector.broadcast %45 : vector<1x1xf32> to vector<2x128xf32>
    %100 = arith.mulf %99, %98 : vector<2x128xf32>
    %101 = arith.addf %96, %100 : vector<2x128xf32>
    %102 = arith.cmpf ogt, %98, %93 : vector<2x128xf32>
    %103 = arith.select %102, %98, %93 : vector<2x128xi1>, vector<2x128xf32>
    %c1_i32 = arith.constant 1 : i32
    %104 = vector.broadcast %c1_i32 : i32 to vector<2x128xi32>
    %105 = arith.select %102, %104, %94 : vector<2x128xi1>, vector<2x128xi32>
    %c0_47 = arith.constant 0 : index
    %c2_48 = arith.constant 2 : index
    %c0_49 = arith.constant 0 : index
    %c0_50 = arith.constant 0 : index
    %106 = vector.load %arg2[%c0_47, %c2_48, %c0_49, %c0_50] : memref<1x4x2x128xf32, #tpu.memory_space<vmem>>, vector<1x1x2x128xf32>
    %107 = vector.shape_cast %106 : vector<1x1x2x128xf32> to vector<2x128xf32>
    %108 = vector.broadcast %68 : vector<1x1xf32> to vector<2x128xf32>
    %109 = arith.mulf %108, %107 : vector<2x128xf32>
    %110 = arith.addf %101, %109 : vector<2x128xf32>
    %111 = arith.cmpf ogt, %107, %103 : vector<2x128xf32>
    %112 = arith.select %111, %107, %103 : vector<2x128xi1>, vector<2x128xf32>
    %c2_i32 = arith.constant 2 : i32
    %113 = vector.broadcast %c2_i32 : i32 to vector<2x128xi32>
    %114 = arith.select %111, %113, %105 : vector<2x128xi1>, vector<2x128xi32>
    %c0_51 = arith.constant 0 : index
    %c3_52 = arith.constant 3 : index
    %c0_53 = arith.constant 0 : index
    %c0_54 = arith.constant 0 : index
    %115 = vector.load %arg2[%c0_51, %c3_52, %c0_53, %c0_54] : memref<1x4x2x128xf32, #tpu.memory_space<vmem>>, vector<1x1x2x128xf32>
    %116 = vector.shape_cast %115 : vector<1x1x2x128xf32> to vector<2x128xf32>
    %117 = vector.broadcast %91 : vector<1x1xf32> to vector<2x128xf32>
    %118 = arith.mulf %117, %116 : vector<2x128xf32>
    %119 = arith.addf %110, %118 : vector<2x128xf32>
    %120 = arith.cmpf ogt, %116, %112 : vector<2x128xf32>
    %c3_i32 = arith.constant 3 : i32
    %121 = vector.broadcast %c3_i32 : i32 to vector<2x128xi32>
    %122 = arith.select %120, %121, %114 : vector<2x128xi1>, vector<2x128xi32>
    %c0_55 = arith.constant 0 : index
    %c0_56 = arith.constant 0 : index
    %c0_57 = arith.constant 0 : index
    %c0_58 = arith.constant 0 : index
    %123 = vector.load %arg3[%c0_55, %c0_56, %c0_57, %c0_58] : memref<1x1x2x128xi32, #tpu.memory_space<vmem>>, vector<1x1x2x128xi32>
    %124 = vector.shape_cast %123 : vector<1x1x2x128xi32> to vector<2x128xi32>
    %125 = vector.shape_cast %122 : vector<2x128xi32> to vector<1x1x2x128xi32>
    tpu.vector_store %arg3[%c0_55, %c0_56, %c0_57, %c0_58], %125 {strides = array<i32>} : memref<1x1x2x128xi32, #tpu.memory_space<vmem>>, vector<1x1x2x128xi32>,
    %c0_59 = arith.constant 0 : index
    %c0_60 = arith.constant 0 : index
    %c0_61 = arith.constant 0 : index
    %c0_62 = arith.constant 0 : index
    %126 = vector.load %arg4[%c0_59, %c0_60, %c0_61, %c0_62] : memref<1x1x2x128xf32, #tpu.memory_space<vmem>>, vector<1x1x2x128xf32>
    %127 = vector.shape_cast %126 : vector<1x1x2x128xf32> to vector<2x128xf32>
    %128 = vector.shape_cast %119 : vector<2x128xf32> to vector<1x1x2x128xf32>
    tpu.vector_store %arg4[%c0_59, %c0_60, %c0_61, %c0_62], %128 {strides = array<i32>} : memref<1x1x2x128xf32, #tpu.memory_space<vmem>>, vector<1x1x2x128xf32>,
    return
  }
  func.func @transform_0(%arg0: i32, %arg1: memref<2x4xf32, #tpu.memory_space<smem>>) -> (i32, i32, i32, i32) {
    %c0_i32 = arith.constant 0 : i32
    %c0_i32_0 = arith.constant 0 : i32
    %c0_i32_1 = arith.constant 0 : i32
    %c0_i32_2 = arith.constant 0 : i32
    return %arg0, %c0_i32, %c0_i32_0, %c0_i32_1 : i32, i32, i32, i32
  }
  func.func @transform_1(%arg0: i32, %arg1: memref<2x4xf32, #tpu.memory_space<smem>>) -> (i32, i32, i32, i32) {
    %c0_i32 = arith.constant 0 : i32
    %c0_i32_0 = arith.constant 0 : i32
    %c0_i32_1 = arith.constant 0 : i32
    %c0_i32_2 = arith.constant 0 : i32
    return %arg0, %c0_i32, %c0_i32_0, %c0_i32_1 : i32, i32, i32, i32
  }
  func.func @transform_2(%arg0: i32, %arg1: memref<2x4xf32, #tpu.memory_space<smem>>) -> (i32, i32, i32, i32) {
    %c0_i32 = arith.constant 0 : i32
    %c0_i32_0 = arith.constant 0 : i32
    %c0_i32_1 = arith.constant 0 : i32
    %c0_i32_2 = arith.constant 0 : i32
    return %arg0, %c0_i32, %c0_i32_0, %c0_i32_1 : i32, i32, i32, i32
  }
}

</mosaic_0001>

<llo_original>
// kernel: tpu_custom_call.1
$region0: #{tpu_custom_call.1}
  #allocation0 [shape = 'u32[]', space=smem, size = 0x4, offset = 0x4, fixed_abs, tag = 'smem constant byte address 0x4 - core index']
  #allocation1 [shape = 'u32[72,128]{1,0:T(1,128)}', space=vmem, size = 0x9000, scoped, tag = 'internal scratch']
  #allocation2 [shape = 's32[1]{0}', space=sflag, size = 0x4, scoped, tag = 'scoped memory for tpu_custom_call.1']
  #allocation3 [shape = 'u8[1024]{0}', space=smem, size = 0x400, scoped, tag = 'prefetched SMEM operand 0']
  %s0 = inlined_call_operand.hbm [shape: f32[2,4], index: 0, kind: input, shape index: {}]
  %s1 = inlined_call_operand.hbm [shape: f32[2,4,2,128], index: 1, kind: input, shape index: {}]
  %s2 = inlined_call_operand.hbm [shape: s32[2,1,2,128], index: 2, kind: output, shape index: {0}]
  %s3 = inlined_call_operand.hbm [shape: f32[2,1,2,128], index: 3, kind: output, shape index: {1}]
  %4 = xla_tuple %s2, %s3
  %s5 = sld [smem:[#allocation0]]
  $region49: #{tpu_custom_call.1} parent=0
    _
  %s7 = ssub.s32 1, %s5
  %s8 = scalar_select 0, %s7, %s5
  %s10 = sshll.u32 %s0, 4
  %s11 = int_to_ptr.hbm [resolvable:$true] %s10
  %13 = dma.hbm_to_smem %s11, 32, [#allocation3], [#allocation2]
  %15 = dma.done [#allocation2], 32
  %16 = sfence
  $region1: #{tpu_custom_call.1} parent=0
    #allocation4 [shape = 'u8[8192]{0}', space=vmem, size = 0x2000, scoped, tag = 'input window, operand 1']
    #allocation5 [shape = 's32[2]{0}', space=sflag, size = 0x8, scoped, tag = 'scoped memory for tpu_custom_call.1']
    #allocation6 [shape = 's32[2]{0}', space=sflag, size = 0x8, scoped, tag = 'scoped memory for tpu_custom_call.1']
    #allocation7 [shape = 'u8[2048]{0}', space=vmem, size = 0x800, scoped, tag = 'output window, operand 0']
    #allocation8 [shape = 'u8[2048]{0}', space=vmem, size = 0x800, scoped, tag = 'output window, operand 1']
    #allocation9 [shape = 's32[2]{0}', space=sflag, size = 0x8, scoped, tag = 'scoped memory for tpu_custom_call.1']
    %17 = vsyncpa [#allocation5], 0
    %s18 = scalar_lea.sflag [#allocation5], 1
    %19 = vsyncpa %s18, 0
    %20 = vsyncpa [#allocation6], 0
    %s21 = scalar_lea.sflag [#allocation6], 1
    %22 = vsyncpa %s21, 0
    %23 = vsyncpa [#allocation9], 0
    %s24 = scalar_lea.sflag [#allocation9], 1
    %25 = vsyncpa %s24, 0
    loop: start=0, step=1, limit=4
    $region2: #{tpu_custom_call.1} parent=1 // loop_pre_header
      _
    $region3: #{tpu_custom_call.1} parent=1 // loop_header
      %s27 = sphi 0, %s31
      %p28 = scmp.ge.s32.totalorder %s27, 4
      %s37 = sphi 0, %s39
      %s40 = sphi 0, %s37
      %s41 = sphi 0, %s40
      %s57 = sphi 0, %s41
      %s63 = sphi 0, %s65
      %s66 = sphi 0, %s63
      %s67 = sphi 0, %s66
      %s83 = sphi 0, %s67
      %s89 = sphi 0, %s91
      %s92 = sphi 0, %s89
      %s93 = sphi 0, %s92
      %s109 = sphi 0, %s93
    $region4: #{tpu_custom_call.1} parent=1 // loop_header_branch
      %30 = sbr.rel (%p28) target = $region8
    $region5: #{tpu_custom_call.1} parent=1 // loop_body
      %s32 = ssub.s32 %s27, 1
      %s33 = ssub.s32 %s27, 2
      %s34 = sadd.s32 %s27, 1
      %s35 = ssub.s32 %s27, %s34
      %p36 = scmp.eq.s32.totalorder %s35, 0
      %s38 = sadd.s32 %s37, 1
      %s39 = scalar_select %p36, %s37, %s38
      %p42 = pneg %p36
      %p43 = scmp.eq.s32.totalorder %s27, 1
      %p44 = por %p42, %p43
      %p45 = scmp.ne.s32.totalorder %s37, %s40
      %p46 = scmp.eq.s32.totalorder %s27, 0
      %p47 = por %p45, %p46
      %p48 = scmp.ne.s32.totalorder %s37, %s40
      %p49 = scmp.eq.s32.totalorder %s32, 1
      %p50 = por %p48, %p49
      %p51 = scmp.ne.s32.totalorder %s40, %s41
      %p52 = scmp.eq.s32.totalorder %s32, 0
      %p53 = por %p51, %p52
      %p54 = scmp.ne.s32.totalorder %s40, %s41
      %p55 = scmp.eq.s32.totalorder %s33, 1
      %p56 = por %p54, %p55
      %p58 = scmp.ne.s32.totalorder %s41, %s57
      %p59 = scmp.eq.s32.totalorder %s33, 0
      %p60 = por %p58, %p59
      %s61 = ssub.s32 %s27, %s34
      %p62 = scmp.eq.s32.totalorder %s61, 0
      %s64 = sadd.s32 %s63, 1
      %s65 = scalar_select %p62, %s63, %s64
      %p68 = pneg %p62
      %p69 = scmp.eq.s32.totalorder %s27, 1
      %p70 = por %p68, %p69
      %p71 = scmp.ne.s32.totalorder %s63, %s66
      %p72 = scmp.eq.s32.totalorder %s27, 0
      %p73 = por %p71, %p72
      %p74 = scmp.ne.s32.totalorder %s63, %s66
      %p75 = scmp.eq.s32.totalorder %s32, 1
      %p76 = por %p74, %p75
      %p77 = scmp.ne.s32.totalorder %s66, %s67
      %p78 = scmp.eq.s32.totalorder %s32, 0
      %p79 = por %p77, %p78
      %p80 = scmp.ne.s32.totalorder %s66, %s67
      %p81 = scmp.eq.s32.totalorder %s33, 1
      %p82 = por %p80, %p81
      %p84 = scmp.ne.s32.totalorder %s67, %s83
      %p85 = scmp.eq.s32.totalorder %s33, 0
      %p86 = por %p84, %p85
      %s87 = ssub.s32 %s27, %s34
      %p88 = scmp.eq.s32.totalorder %s87, 0
      %s90 = sadd.s32 %s89, 1
      %s91 = scalar_select %p88, %s89, %s90
      %p94 = pneg %p88
      %p95 = scmp.eq.s32.totalorder %s27, 1
      %p96 = por %p94, %p95
      %p97 = scmp.ne.s32.totalorder %s89, %s92
      %p98 = scmp.eq.s32.totalorder %s27, 0
      %p99 = por %p97, %p98
      %p100 = scmp.ne.s32.totalorder %s89, %s92
      %p101 = scmp.eq.s32.totalorder %s32, 1
      %p102 = por %p100, %p101
      %p103 = scmp.ne.s32.totalorder %s92, %s93
      %p104 = scmp.eq.s32.totalorder %s32, 0
      %p105 = por %p103, %p104
      %p106 = scmp.ne.s32.totalorder %s92, %s93
      %p107 = scmp.eq.s32.totalorder %s33, 1
      %p108 = por %p106, %p107
      %p110 = scmp.ne.s32.totalorder %s93, %s109
      %p111 = scmp.eq.s32.totalorder %s33, 0
      %p112 = por %p110, %p111
      %p113 = scmp.le.s32.totalorder 1, %s27
      %p114 = scmp.lt.s32.totalorder %s27, 3
      %p115 = pnand %p113, %p114
      %p116 = pneg %p115
      // Predicated region
      $region9: #{tpu_custom_call.1} parent=5 // pred_check
        _
      $region10: #{tpu_custom_call.1} parent=5 // pred_check_branch
        %118 = sbr.rel (%p115) target = $region12
      $region11: #{tpu_custom_call.1} parent=5 // pred_region
        %s119 = ssub.s32 %s27, 1
      $region12: #{tpu_custom_call.1} parent=5 // pred_fallthru
        _
      %p120 = scmp.lt.s32.totalorder %s27, 2
      // Predicated region
      $region13: #{tpu_custom_call.1} parent=5 // pred_check
        %p121 = pneg %p120
      $region14: #{tpu_custom_call.1} parent=5 // pred_check_branch
        %123 = sbr.rel (%p121) target = $region16
      $region15: #{tpu_custom_call.1} parent=5 // pred_region
        // Predicated region
        $region17: #{tpu_custom_call.1} parent=15 // pred_check
          %p124 = pneg %p47
        $region18: #{tpu_custom_call.1} parent=15 // pred_check_branch
          %126 = sbr.rel (%p124) target = $region20
        $region19: #{tpu_custom_call.1} parent=15 // pred_region
          %s127 = sand.u32 %s37, 1
          %s128 = scalar_lea.sflag [#allocation5], %s127
          %s129 = sand.u32 %s37, 1
          %s130 = smul.addr %s129, 8
          %s131 = scalar_lea.vmem [#allocation4], %s130
          %133 = vsyncadd %s128, 0
          %s134 = smul.addr %s27, 4
          %s135 = smul.addr %s134, 2
          %s136 = scalar_lea.hbm %s1, %s135
          %s137 = sshll.u32 %s136, 4
          %s138 = int_to_ptr.hbm [resolvable:$true] %s137
          %s139 = sshll.u32 %s131, 4
          %s140 = int_to_ptr.vmem [resolvable:$true] %s139
          %145 = dma.hbm_to_vmem [thread:$0]  %s138, 128, %s140, %s128, 32, 32, 2
        $region20: #{tpu_custom_call.1} parent=15 // pred_fallthru
          _
      $region16: #{tpu_custom_call.1} parent=5 // pred_fallthru
        _
      %p146 = scmp.le.s32.totalorder 1, %s27
      %p147 = scmp.lt.s32.totalorder %s27, 3
      %p148 = pnand %p146, %p147
      %p149 = pneg %p148
      // Predicated region
      $region21: #{tpu_custom_call.1} parent=5 // pred_check
        _
      $region22: #{tpu_custom_call.1} parent=5 // pred_check_branch
        %151 = sbr.rel (%p148) target = $region24
      $region23: #{tpu_custom_call.1} parent=5 // pred_region
        %s152 = ssub.s32 %s27, 1
        %s153 = sand.u32 %s40, 1
        %s154 = scalar_lea.sflag [#allocation5], %s153
        %s155 = sand.u32 %s40, 1
        %s156 = smul.addr %s155, 8
        %s157 = scalar_lea.vmem [#allocation4], %s156
        // Predicated region
        $region25: #{tpu_custom_call.1} parent=23 // pred_check
          %p158 = pneg %p53
        $region26: #{tpu_custom_call.1} parent=23 // pred_check_branch
          %160 = sbr.rel (%p158) target = $region28
        $region27: #{tpu_custom_call.1} parent=23 // pred_region
          %162 = dma.done %s154, 128
        $region28: #{tpu_custom_call.1} parent=23 // pred_fallthru
          _
        %s163 = sand.u32 %s40, 1
        %s164 = scalar_lea.sflag [#allocation5], %s163
        %s165 = sand.u32 %s40, 1
        %s166 = smul.addr %s165, 8
        %s167 = scalar_lea.vmem [#allocation4], %s166
        %p168 = pneg %p53
        %p169 = pneg %p50
        %p170 = pneg %p79
        %p171 = pneg %p76
        %s172 = sand.u32 %s66, 1
        %s173 = scalar_lea.sflag [#allocation6], %s172
        %s174 = sand.u32 %s66, 1
        %s175 = smul.addr %s174, 2
        %s176 = scalar_lea.vmem [#allocation7], %s175
        %p177 = pneg %p105
        %p178 = pneg %p102
        %s179 = sand.u32 %s92, 1
        %s180 = scalar_lea.sflag [#allocation9], %s179
        %s181 = sand.u32 %s92, 1
        %s182 = smul.addr %s181, 2
        %s183 = scalar_lea.vmem [#allocation8], %s182
        %v184 = vld [vmem:[%s157] sm:$0x3]
        %vm185 = vcmask 1041408
        %v186 = vsel %vm185, %v184, 0.0
        %187 = vadd.xlane.f32.xlu0 %v186
        %v188 = vpop.xlane.xlu0 %187
        %v189 = vrot.slane %v188, 4
        %v190 = vadd.f32 %v188, %v189
        %v191 = vrot.slane %v190, 2
        %v192 = vadd.f32 %v190, %v191
        %v193 = vrot.slane %v192, 1
        %v194 = vadd.f32 %v192, %v193
        %s195 = vtos %v194
        %v196 = vstv %s195
        %v197 = vadd.f32 %v196, 1.0
        %v198 = vrcp.pop %v197
        %v199 = vmul.f32 %v197, %v198
        %v200 = vsub.f32 1.0, %v199
        %v201 = vmul.f32 %v198, %v200
        %v202 = vadd.f32 %v198, %v201
        %vm203 = vweird.f32 %v197
        %vm204 = vweird.f32 %v198
        %vm205 = vmor %vm203, %vm204
        %v206 = vsel %vm205, %v198, %v202
        %v207 = vand.u32 2147483647, %v197
        %vm208 = vcmp.eq.f32.partialorder %v207, 8.507059e+37
        %v209 = vand.u32 %v197, 2147483648
        %v210 = vor.u32 1.1754944e-38, %v209
        %v211 = vsel %vm208, %v210, %v206
        %v212 = vmul.f32 256.0, %v211
        %v213 = vlog2.pop %v212
        %v214 = vmul.f32 %v213, 0.6931472
        %v215 = vmul.f32 %v214, 0.33333334
        %v216 = vmul.f32 %v215, 1.442695
        %v217 = vpow.pop %v216
        %s218 = smul.u32 %s32, 128
        %s219 = sld [smem:[#allocation3 + %s218]]
        %v220 = vstv %s219
        %v221 = vmul.f32 %v217, %v220
        %v222 = vmax.f32 %v221, 1.0
        %v223 = vmin.f32 %v222, 30.0
        %s224 = scalar_lea.vmem %s157, 2 [#allocation4]
        %v225 = vld [vmem:[%s224] sm:$0x3]
        %v226 = vsel %vm185, %v225, 0.0
        %227 = vadd.xlane.f32.xlu0 %v226
        %v228 = vpop.xlane.xlu0 %227
        %v229 = vrot.slane %v228, 4
        %v230 = vadd.f32 %v228, %v229
        %v231 = vrot.slane %v230, 2
        %v232 = vadd.f32 %v230, %v231
        %v233 = vrot.slane %v232, 1
        %v234 = vadd.f32 %v232, %v233
        %s235 = vtos %v234
        %v236 = vstv %s235
        %v237 = vadd.f32 %v236, 1.0
        %v238 = vrcp.pop %v237
        %v239 = vmul.f32 %v237, %v238
        %v240 = vsub.f32 1.0, %v239
        %v241 = vmul.f32 %v238, %v240
        %v242 = vadd.f32 %v238, %v241
        %vm243 = vweird.f32 %v237
        %vm244 = vweird.f32 %v238
        %vm245 = vmor %vm243, %vm244
        %v246 = vsel %vm245, %v238, %v242
        %v247 = vand.u32 2147483647, %v237
        %vm248 = vcmp.eq.f32.partialorder %v247, 8.507059e+37
        %v249 = vand.u32 %v237, 2147483648
        %v250 = vor.u32 1.1754944e-38, %v249
        %v251 = vsel %vm248, %v250, %v246
        %v252 = vmul.f32 256.0, %v251
        %v253 = vlog2.pop %v252
        %v254 = vmul.f32 %v253, 0.6931472
        %v255 = vmul.f32 %v254, 0.33333334
        %v256 = vmul.f32 %v255, 1.442695
        %v257 = vpow.pop %v256
        %s258 = sadd.s32 %s218, 1
        %s259 = sld [smem:[#allocation3 + %s258]]
        %v260 = vstv %s259
        %v261 = vmul.f32 %v257, %v260
        %v262 = vmax.f32 %v261, 1.0
        %v263 = vmin.f32 %v262, 30.0
        %s264 = scalar_lea.vmem %s157, 4 [#allocation4]
        %v265 = vld [vmem:[%s264] sm:$0x3]
        %v266 = vsel %vm185, %v265, 0.0
        %267 = vadd.xlane.f32.xlu0 %v266
        %v268 = vpop.xlane.xlu0 %267
        %v269 = vrot.slane %v268, 4
        %v270 = vadd.f32 %v268, %v269
        %v271 = vrot.slane %v270, 2
        %v272 = vadd.f32 %v270, %v271
        %v273 = vrot.slane %v272, 1
        %v274 = vadd.f32 %v272, %v273
        %s275 = vtos %v274
        %v276 = vstv %s275
        %v277 = vadd.f32 %v276, 1.0
        %v278 = vrcp.pop %v277
        %v279 = vmul.f32 %v277, %v278
        %v280 = vsub.f32 1.0, %v279
        %v281 = vmul.f32 %v278, %v280
        %v282 = vadd.f32 %v278, %v281
        %vm283 = vweird.f32 %v277
        %vm284 = vweird.f32 %v278
        %vm285 = vmor %vm283, %vm284
        %v286 = vsel %vm285, %v278, %v282
        %v287 = vand.u32 2147483647, %v277
        %vm288 = vcmp.eq.f32.partialorder %v287, 8.507059e+37
        %v289 = vand.u32 %v277, 2147483648
        %v290 = vor.u32 1.1754944e-38, %v289
        %v291 = vsel %vm288, %v290, %v286
        %v292 = vmul.f32 256.0, %v291
        %v293 = vlog2.pop %v292
        %v294 = vmul.f32 %v293, 0.6931472
        %v295 = vmul.f32 %v294, 0.33333334
        %v296 = vmul.f32 %v295, 1.442695
        %v297 = vpow.pop %v296
        %s298 = sadd.s32 %s218, 2
        %s299 = sld [smem:[#allocation3 + %s298]]
        %v300 = vstv %s299
        %v301 = vmul.f32 %v297, %v300
        %v302 = vmax.f32 %v301, 1.0
        %v303 = vmin.f32 %v302, 30.0
        %s304 = scalar_lea.vmem %s157, 6 [#allocation4]
        %v305 = vld [vmem:[%s304] sm:$0x3]
        %v306 = vsel %vm185, %v305, 0.0
        %307 = vadd.xlane.f32.xlu0 %v306
        %v308 = vpop.xlane.xlu0 %307
        %v309 = vrot.slane %v308, 4
        %v310 = vadd.f32 %v308, %v309
        %v311 = vrot.slane %v310, 2
        %v312 = vadd.f32 %v310, %v311
        %v313 = vrot.slane %v312, 1
        %v314 = vadd.f32 %v312, %v313
        %s315 = vtos %v314
        %v316 = vstv %s315
        %v317 = vadd.f32 %v316, 1.0
        %v318 = vrcp.pop %v317
        %v319 = vmul.f32 %v317, %v318
        %v320 = vsub.f32 1.0, %v319
        %v321 = vmul.f32 %v318, %v320
        %v322 = vadd.f32 %v318, %v321
        %vm323 = vweird.f32 %v317
        %vm324 = vweird.f32 %v318
        %vm325 = vmor %vm323, %vm324
        %v326 = vsel %vm325, %v318, %v322
        %v327 = vand.u32 2147483647, %v317
        %vm328 = vcmp.eq.f32.partialorder %v327, 8.507059e+37
        %v329 = vand.u32 %v317, 2147483648
        %v330 = vor.u32 1.1754944e-38, %v329
        %v331 = vsel %vm328, %v330, %v326
        %v332 = vmul.f32 256.0, %v331
        %v333 = vlog2.pop %v332
        %v334 = vmul.f32 %v333, 0.6931472
        %v335 = vmul.f32 %v334, 0.33333334
        %v336 = vmul.f32 %v335, 1.442695
        %v337 = vpow.pop %v336
        %s338 = sadd.s32 %s218, 3
        %s339 = sld [smem:[#allocation3 + %s338]]
        %v340 = vstv %s339
        %v341 = vmul.f32 %v337, %v340
        %v342 = vmax.f32 %v341, 1.0
        %v343 = vmin.f32 %v342, 30.0
        %v344 = vmul.f32 %v223, %v184
        %v345 = vmul.f32 %v263, %v225
        %v346 = vadd.f32 %v344, %v345
        %vm347 = vcmp.gt.f32.partialorder %v225, %v184
        %v348 = vsel %vm347, %v225, %v184
        %v349 = vsel %vm347, 1, 0
        %v350 = vmul.f32 %v303, %v265
        %v351 = vadd.f32 %v346, %v350
        %vm352 = vcmp.gt.f32.partialorder %v265, %v348
        %v353 = vsel %vm352, %v265, %v348
        %v354 = vsel %vm352, 2, %v349
        %v355 = vmul.f32 %v343, %v305
        %v356 = vadd.f32 %v351, %v355
        %vm357 = vcmp.gt.f32.partialorder %v305, %v353
        %v358 = vsel %vm357, 3, %v354
        %359 = vst [vmem:[%s176] sm:$0x3] %v358
        %360 = vst [vmem:[%s183] sm:$0x3] %v356
        %s361 = sand.u32 %s66, 1
        %s362 = scalar_lea.sflag [#allocation6], %s361
        %s363 = sand.u32 %s66, 1
        %s364 = smul.addr %s363, 2
        %s365 = scalar_lea.vmem [#allocation7], %s364
        %s366 = sand.u32 %s92, 1
        %s367 = scalar_lea.sflag [#allocation9], %s366
        %s368 = sand.u32 %s92, 1
        %s369 = smul.addr %s368, 2
        %s370 = scalar_lea.vmem [#allocation8], %s369
        // Predicated region
        $region29: #{tpu_custom_call.1} parent=23 // pred_check
          %p371 = pneg %p76
        $region30: #{tpu_custom_call.1} parent=23 // pred_check_branch
          %373 = sbr.rel (%p371) target = $region32
        $region31: #{tpu_custom_call.1} parent=23 // pred_region
          %375 = vsyncadd %s362, 0
          %s376 = smul.addr %s32, 2
          %s377 = scalar_lea.hbm %s2, %s376
          %s379 = sshll.u32 %s365, 4
          %s380 = int_to_ptr.vmem [resolvable:$true] %s379
          %s381 = sshll.u32 %s377, 4
          %s382 = int_to_ptr.hbm [resolvable:$true] %s381
          %384 = dma.vmem_to_hbm [thread:$0]  %s380, 32, %s382, %s362
        $region32: #{tpu_custom_call.1} parent=23 // pred_fallthru
          _
        // Predicated region
        $region33: #{tpu_custom_call.1} parent=23 // pred_check
          %p385 = pneg %p102
        $region34: #{tpu_custom_call.1} parent=23 // pred_check_branch
          %387 = sbr.rel (%p385) target = $region36
        $region35: #{tpu_custom_call.1} parent=23 // pred_region
          %389 = vsyncadd %s367, 0
          %s390 = smul.addr %s32, 2
          %s391 = scalar_lea.hbm %s3, %s390
          %s393 = sshll.u32 %s370, 4
          %s394 = int_to_ptr.vmem [resolvable:$true] %s393
          %s395 = sshll.u32 %s391, 4
          %s396 = int_to_ptr.hbm [resolvable:$true] %s395
          %398 = dma.vmem_to_hbm [thread:$0]  %s394, 32, %s396, %s367
        $region36: #{tpu_custom_call.1} parent=23 // pred_fallthru
          _
      $region24: #{tpu_custom_call.1} parent=5 // pred_fallthru
        _
      %p399 = scmp.le.s32.totalorder 2, %s27
      // Predicated region
      $region37: #{tpu_custom_call.1} parent=5 // pred_check
        %p400 = pneg %p399
      $region38: #{tpu_custom_call.1} parent=5 // pred_check_branch
        %402 = sbr.rel (%p400) target = $region40
      $region39: #{tpu_custom_call.1} parent=5 // pred_region
        %s403 = ssub.s32 %s27, 2
        // Predicated region
        $region41: #{tpu_custom_call.1} parent=39 // pred_check
          %p404 = pneg %p82
        $region42: #{tpu_custom_call.1} parent=39 // pred_check_branch
          %406 = sbr.rel (%p404) target = $region44
        $region43: #{tpu_custom_call.1} parent=39 // pred_region
          %s407 = sand.u32 %s67, 1
          %s408 = scalar_lea.sflag [#allocation6], %s407
          %s409 = sand.u32 %s67, 1
          %s410 = smul.addr %s409, 2
          %s411 = scalar_lea.vmem [#allocation7], %s410
          %413 = dma.done %s408, 32
        $region44: #{tpu_custom_call.1} parent=39 // pred_fallthru
          _
        // Predicated region
        $region45: #{tpu_custom_call.1} parent=39 // pred_check
          %p414 = pneg %p108
        $region46: #{tpu_custom_call.1} parent=39 // pred_check_branch
          %416 = sbr.rel (%p414) target = $region48
        $region47: #{tpu_custom_call.1} parent=39 // pred_region
          %s417 = sand.u32 %s93, 1
          %s418 = scalar_lea.sflag [#allocation9], %s417
          %s419 = sand.u32 %s93, 1
          %s420 = smul.addr %s419, 2
          %s421 = scalar_lea.vmem [#allocation8], %s420
          %423 = dma.done %s418, 32
        $region48: #{tpu_custom_call.1} parent=39 // pred_fallthru
          _
      $region40: #{tpu_custom_call.1} parent=5 // pred_fallthru
        _
    $region6: #{tpu_custom_call.1} parent=1 // loop_footer
      %s31 = sadd.s32 1, %s27
    $region7: #{tpu_custom_call.1} parent=1 // loop_footer_branch
      %26 = sbr.rel target = $region3
    $region8: #{tpu_custom_call.1} parent=1 // loop_exit
      _
    %424 = vsyncpa [#allocation5], 1
    %s425 = scalar_lea.sflag [#allocation5], 1
    %426 = vsyncpa %s425, 1
    %427 = vsyncpa [#allocation6], 1
    %s428 = scalar_lea.sflag [#allocation6], 1
    %429 = vsyncpa %s428, 1
    %430 = vsyncpa [#allocation9], 1
    %s431 = scalar_lea.sflag [#allocation9], 1
    %432 = vsyncpa %s431, 1

</llo_original>
